<compile_context>
chip_gen: v5e
topology: v5e:2x2
jax: 0.10.0
libtpu: 0.0.40
codegen_flags: <defaults>
</compile_context>

<pallas_src>
import functools

import jax
import jax.numpy as jnp
from jax.experimental import pallas as pl
from jax.experimental.pallas import tpu as pltpu

_NEG_INF = -1e30  # stand-in for the module-level -INF constant (kept in fp32)


# ----------------------------------------------------------------------------
# Kernel bodies
# ----------------------------------------------------------------------------
def _attend(x_ref, w1_ref, w2_ref, bias_ref, out_ref, *, s_valid, s_chunk):
    """One batch tile.

    x_ref   : (BT, S_pad, D) in its native dtype (fp32 or bf16)
    w1_ref  : (D, H)   same dtype as x
    w2_ref  : (1, H)   same dtype as x
    bias_ref: optional (BT, S_pad) fp32 additive mask bias (0 / -1e30)
    out_ref : (BT, D)
    """
    bt, s_pad, d = x_ref.shape
    h_dim = w1_ref.shape[1]

    # Tall 2-D MXU matmul in x's native dtype with fp32 accumulation.
    # s_pad is a multiple of 8 -> these reshapes are layout-preserving.
    x2d = x_ref[...].reshape(bt * s_pad, d)                              # (BT*S, D)
    h = jnp.tanh(jnp.dot(x2d, w1_ref[...],
                         preferred_element_type=jnp.float32))            # (BT*S, H) f32
    h3 = h.reshape(bt, s_pad, h_dim)                                     # (BT, S, H)

    # Rank-1 score contraction on the VPU + lane (XLU) reduce instead of an
    # N=1 MXU matmul.
    w2b = w2_ref[...].astype(jnp.float32).reshape(1, 1, h_dim)           # (1, 1, H)
    scores = jnp.sum(h3 * w2b, axis=-1)                                  # (BT, S) f32

    if bias_ref is not None:
        # Additive bias: 0 where visible, -1e30 where masked (incl. S padding).
        # Note: fully-masked rows yield a uniform softmax here, whereas
        # PyTorch's true -inf masked_fill would yield NaN.
        scores = scores + bias_ref[...]
    if s_valid < s_pad:
        # Maskless path with padded sequence: mask the pad columns (static).
        col = jax.lax.broadcasted_iota(jnp.int32, (bt, s_pad), 1)
        scores = jnp.where(col < s_valid, scores, _NEG_INF)

    # Numerically stable softmax over the sequence axis (all fp32 / EUP).
    m = jnp.max(scores, axis=-1, keepdims=True)
    e = jnp.exp(scores - m)
    denom = jnp.sum(e, axis=-1, keepdims=True)
    probs = e * pl.reciprocal(denom, approx=True)                        # (BT, S)

    # Weighted sum over S: chunked VPU multiply + reduce, accumulated in fp32.
    # Avoids materializing the full (BT, S, D) fp32 product.
    acc = jnp.zeros((bt, d), jnp.float32)
    for c0 in range(0, s_pad, s_chunk):
        ch = min(s_chunk, s_pad - c0)                                    # static
        xc = x_ref[:, c0:c0 + ch, :].astype(jnp.float32)                 # (BT, ch, D)
        pc = probs[:, c0:c0 + ch]                                        # (BT, ch)
        acc = acc + jnp.sum(pc[:, :, None] * xc, axis=1)
    out_ref[...] = acc.astype(out_ref.dtype)


def _kernel_nomask(x_ref, w1_ref, w2_ref, out_ref, *, s_valid, s_chunk):
    _attend(x_ref, w1_ref, w2_ref, None, out_ref,
            s_valid=s_valid, s_chunk=s_chunk)


def _kernel_masked(x_ref, w1_ref, w2_ref, bias_ref, out_ref, *, s_valid, s_chunk):
    _attend(x_ref, w1_ref, w2_ref, bias_ref, out_ref,
            s_valid=s_valid, s_chunk=s_chunk)


# ----------------------------------------------------------------------------
# Wrapper
# ----------------------------------------------------------------------------
def _round_up(n, m):
    return ((n + m - 1) // m) * m


def _default_vmem_limit():
    """Scoped VMEM limit: ~70% of physical, capped at 64 MiB (v5e/v6e have
    128 MiB physical; v7x has 64 MiB so this lands at ~44 MiB there)."""
    try:
        cap = getattr(pltpu.get_tpu_info(), "vmem_capacity_bytes", None)
    except Exception:
        cap = None
    if not cap:
        return 48 * 1024 * 1024
    return int(min(64 * 1024 * 1024, int(cap * 0.7)))


def self_attention(x, w1, w2, attention_mask=None, *, b_tile=None,
                   vmem_limit_bytes=None, s_chunk=256):
    """x: (B, S, D); w1: (D, H); w2: (H, 1); mask: (B, S) of {0,1} or None.

    Returns (B, D) in x.dtype.
    """
    B, S, D = x.shape
    Dw, H = w1.shape
    assert Dw == D, "W1 first dim must match feature dim of x"

    # Single matmul dtype: cast weights to x.dtype so a bf16 x uses the native
    # bf16xbf16->f32 MXU path (fp32 intermediates are kept regardless).
    w1 = w1.astype(x.dtype)
    w2_row = jnp.reshape(w2, (1, H)).astype(x.dtype)

    if vmem_limit_bytes is None:
        vmem_limit_bytes = _default_vmem_limit()

    # Pad S to a multiple of 8 so in-kernel reshapes are layout-preserving.
    S_pad = _round_up(max(S, 8), 8)
    if S_pad != S:
        x = jnp.pad(x, ((0, 0), (0, S_pad - S), (0, 0)))
        if attention_mask is not None:
            # zero-mask the padded positions
            attention_mask = jnp.pad(attention_mask, ((0, 0), (0, S_pad - S)))

    x_item = jnp.dtype(x.dtype).itemsize
    w_item = jnp.dtype(w1.dtype).itemsize
    s_chunk_eff = max(8, (min(int(s_chunk), S_pad) // 8) * 8)

    b_rows = _round_up(B, 8)
    if b_tile is None:
        # VMEM accounting per batch row of a tile (everything live at once).
        per_row = (2 * S_pad * D * x_item        # x tile, double-buffered
                   + S_pad * H * 4               # fp32 h (tanh output)
                   + 4 * S_pad * 4               # scores / exp / probs temps
                   + 2 * D * x_item              # output tile, double-buffered
                   + D * 4                       # fp32 accumulator
                   + s_chunk_eff * D * 4)        # per-chunk fp32 product
        if attention_mask is not None:
            per_row += 2 * S_pad * 4             # bias tile, double-buffered
        fixed = 2 * D * H * w_item + 2 * H * w_item + (1 << 20)  # weights + headroom
        budget = int(vmem_limit_bytes * 0.65)
        bt = max(8, ((budget - fixed) // max(per_row, 1)) // 8 * 8)
        b_tile = min(bt, b_rows, 1024)
        # Keep >= 2 grid steps when the batch allows it so v7x's two
        # TensorCores both get work (harmless on v5e/v6e).
        if b_tile >= b_rows and b_rows >= 16:
            b_tile = max(8, ((b_rows // 2) // 8) * 8)
    else:
        b_tile = max(8, _round_up(min(int(b_tile), b_rows), 8))

    B_pad = _round_up(B, b_tile)
    if B_pad != B:
        x = jnp.pad(x, ((0, B_pad - B), (0, 0), (0, 0)))
        if attention_mask is not None:
            attention_mask = jnp.pad(attention_mask, ((0, B_pad - B), (0, 0)),
                                     constant_values=1)
    grid = (B_pad // b_tile,)

    x_spec = pl.BlockSpec((b_tile, S_pad, D), lambda i: (i, 0, 0))
    w1_spec = pl.BlockSpec((D, H), lambda i: (0, 0))       # resident across grid
    w2_spec = pl.BlockSpec((1, H), lambda i: (0, 0))       # resident across grid
    out_spec = pl.BlockSpec((b_tile, D), lambda i: (i, 0))

    compiler_params = pltpu.CompilerParams(
        dimension_semantics=("parallel",),   # batch tiles shard across TCs on v7x
        vmem_limit_bytes=int(vmem_limit_bytes),
    )
    out_shape = jax.ShapeDtypeStruct((B_pad, D), x.dtype)

    if attention_mask is None:
        # Maskless variant: no synthetic mask DMA; S padding handled via a
        # static in-kernel iota compare.
        kern = functools.partial(_kernel_nomask, s_valid=S, s_chunk=s_chunk_eff)
        out = pl.pallas_call(
            kern,
            out_shape=out_shape,
            grid=grid,
            in_specs=[x_spec, w1_spec, w2_spec],
            out_specs=out_spec,
            compiler_params=compiler_params,
        )(x, w1, w2_row)
    else:
        # Precomputed additive bias: 0 where visible, -1e30 where masked
        # (this also covers the padded S columns, which got mask == 0).
        bias = (attention_mask.astype(jnp.float32) - 1.0) * 1e30
        bias_spec = pl.BlockSpec((b_tile, S_pad), lambda i: (i, 0))
        kern = functools.partial(_kernel_masked, s_valid=S_pad, s_chunk=s_chunk_eff)
        out = pl.pallas_call(
            kern,
            out_shape=out_shape,
            grid=grid,
            in_specs=[x_spec, w1_spec, w2_spec, bias_spec],
            out_specs=out_spec,
            compiler_params=compiler_params,
        )(x, w1, w2_row, bias)

    return out[:B] if B_pad != B else out


# ----------------------------------------------------------------------------
# Reference + test
# ----------------------------------------------------------------------------
def _xavier_uniform(key, shape, dtype=jnp.float32):
    fan_in, fan_out = shape[0], shape[1]
    bound = (6.0 / (fan_in + fan_out)) ** 0.5
    return jax.random.uniform(key, shape, dtype, minval=-bound, maxval=bound)


def _reference(x, w1, w2, attention_mask=None):
    B, S, D = x.shape
    scores = (jnp.tanh(x.reshape(-1, D) @ w1) @ w2).reshape(B, S)
    if attention_mask is not None:
        scores = jnp.where(attention_mask > 0.5, scores, _NEG_INF)
    probs = jax.nn.softmax(scores, axis=-1)
    return jnp.einsum("bs,bsd->bd", probs, x)


if __name__ == "__main__":
    key = jax.random.PRNGKey(0)
    k_x, k_w1, k_w2, k_x2, k_x3 = jax.random.split(key, 5)

    B, S, D, H = 2, 8, 32, 32

    x = jax.random.normal(k_x, (B, S, D), dtype=jnp.float32)
    W1 = _xavier_uniform(k_w1, (D, H))
    W2 = _xavier_uniform(k_w2, (H, 1))
    # deterministic mask: last two positions of each sequence masked out
    mask = jnp.ones((B, S), dtype=jnp.float32).at[:, -2:].set(0.0)

    # tolerance slightly loosened because the softmax normalizer uses the
    # (approximate) EUP reciprocal
    TOL = dict(atol=2e-3, rtol=2e-3)

    out_nomask = jax.block_until_ready(self_attention(x, W1, W2, None))
    out_mask = jax.block_until_ready(self_attention(x, W1, W2, mask))
    assert out_nomask.shape == (B, D)
    assert out_mask.shape == (B, D)
    assert jnp.allclose(out_nomask, _reference(x, W1, W2, None), **TOL)
    assert jnp.allclose(out_mask, _reference(x, W1, W2, mask), **TOL)

    # Case 2: batch not a multiple of the tile -> grid > 1 and batch padding.
    B2 = 20
    x2 = jax.random.normal(k_x2, (B2, S, D), dtype=jnp.float32)
    mask2 = jnp.ones((B2, S), dtype=jnp.float32).at[:, -3:].set(0.0)
    out2 = jax.block_until_ready(self_attention(x2, W1, W2, mask2, b_tile=8))
    assert out2.shape == (B2, D)
    assert jnp.allclose(out2, _reference(x2, W1, W2, mask2), **TOL)

    # Case 3: S not a multiple of 8 -> exercises sequence padding, both paths.
    B3, S3 = 4, 10
    x3 = jax.random.normal(k_x3, (B3, S3, D), dtype=jnp.float32)
    mask3 = jnp.ones((B3, S3), dtype=jnp.float32).at[:, -3:].set(0.0)
    out3a = jax.block_until_ready(self_attention(x3, W1, W2, None))
    out3b = jax.block_until_ready(self_attention(x3, W1, W2, mask3))
    assert out3a.shape == (B3, D) and out3b.shape == (B3, D)
    assert jnp.allclose(out3a, _reference(x3, W1, W2, None), **TOL)
    assert jnp.allclose(out3b, _reference(x3, W1, W2, mask3), **TOL)

    print("KERNEL_OK")
</pallas_src>

<mosaic_0001>
module attributes {stable_mosaic.version = 11 : i64} {
  func.func @_kernel_nomask(%arg0: i32, %arg1: memref<8x8x32xf32, #tpu.memory_space<vmem>>, %arg2: memref<32x32xf32, #tpu.memory_space<vmem>>, %arg3: memref<1x32xf32, #tpu.memory_space<vmem>>, %arg4: memref<8x32xf32, #tpu.memory_space<vmem>>) attributes {dimension_semantics = [#tpu.dimension_semantics<parallel>], iteration_bounds = array<i64: 1>, scalar_prefetch = 0 : i64, scratch_operands = 0 : i64, tpu.core_type = #tpu.core_type<tc>, window_params = [{transform_indices = @transform_0, window_bounds = array<i64: 8, 8, 32>}, {pipeline_mode = #tpu.pipeline_mode<synchronous>, transform_indices = @transform_1, window_bounds = array<i64: 32, 32>}, {pipeline_mode = #tpu.pipeline_mode<synchronous>, transform_indices = @transform_2, window_bounds = array<i64: 1, 32>}, {transform_indices = @transform_3, window_bounds = array<i64: 8, 32>}]} {
    %c0 = arith.constant 0 : index
    %c0_0 = arith.constant 0 : index
    %c0_1 = arith.constant 0 : index
    %0 = vector.load %arg1[%c0, %c0_0, %c0_1] : memref<8x8x32xf32, #tpu.memory_space<vmem>>, vector<8x8x32xf32>
    %1 = vector.shape_cast %0 : vector<8x8x32xf32> to vector<64x32xf32>
    %c0_2 = arith.constant 0 : index
    %c0_3 = arith.constant 0 : index
    %2 = vector.load %arg2[%c0_2, %c0_3] : memref<32x32xf32, #tpu.memory_space<vmem>>, vector<32x32xf32>
    %cst = arith.constant dense<0.000000e+00> : vector<64x32xf32>
    %3 = tpu.matmul %1, %2, %cst {dimension_numbers = #tpu.dot_dimension_numbers<[1], [0], [0], [1], [0, 0, 1, 1], [], []>} : vector<64x32xf32>, vector<32x32xf32>, vector<64x32xf32> -> vector<64x32xf32>
    %4 = math.tanh %3 : vector<64x32xf32>
    %5 = vector.shape_cast %4 : vector<64x32xf32> to vector<8x8x32xf32>
    %c0_4 = arith.constant 0 : index
    %c0_5 = arith.constant 0 : index
    %6 = vector.load %arg3[%c0_4, %c0_5] : memref<1x32xf32, #tpu.memory_space<vmem>>, vector<1x32xf32>
    %7 = vector.shape_cast %6 : vector<1x32xf32> to vector<1x1x32xf32>
    %8 = vector.broadcast %7 : vector<1x1x32xf32> to vector<8x8x32xf32>
    %9 = arith.mulf %5, %8 : vector<8x8x32xf32>
    %cst_6 = arith.constant dense<0.000000e+00> : vector<8x8xf32>
    %10 = vector.multi_reduction <add>, %9, %cst_6 [2] : vector<8x8x32xf32> to vector<8x8xf32>
    %cst_7 = arith.constant dense<0xFF800000> : vector<8xf32>
    %11 = vector.multi_reduction <maximumf>, %10, %cst_7 [1] : vector<8x8xf32> to vector<8xf32>
    %12 = vector.shape_cast %11 : vector<8xf32> to vector<8x1xf32>
    %13 = vector.broadcast %12 : vector<8x1xf32> to vector<8x8xf32>
    %14 = arith.subf %10, %13 : vector<8x8xf32>
    %15 = math.exp %14 : vector<8x8xf32>
    %cst_8 = arith.constant dense<0.000000e+00> : vector<8xf32>
    %16 = vector.multi_reduction <add>, %15, %cst_8 [1] : vector<8x8xf32> to vector<8xf32>
    %17 = vector.shape_cast %16 : vector<8xf32> to vector<8x1xf32>
    %18 = tpu.reciprocal %17 {approx = true} : vector<8x1xf32> -> vector<8x1xf32>
    %19 = vector.broadcast %18 : vector<8x1xf32> to vector<8x8xf32>
    %20 = arith.mulf %15, %19 : vector<8x8xf32>
    %cst_9 = arith.constant 0.000000e+00 : f32
    %21 = vector.broadcast %cst_9 : f32 to vector<8x32xf32>
    %c0_10 = arith.constant 0 : index
    %c0_11 = arith.constant 0 : index
    %c0_12 = arith.constant 0 : index
    %22 = vector.load %arg1[%c0_10, %c0_11, %c0_12] : memref<8x8x32xf32, #tpu.memory_space<vmem>>, vector<8x8x32xf32>
    %23 = vector.shape_cast %20 : vector<8x8xf32> to vector<8x8x1xf32>
    %24 = vector.broadcast %23 : vector<8x8x1xf32> to vector<8x8x32xf32>
    %25 = arith.mulf %24, %22 : vector<8x8x32xf32>
    %cst_13 = arith.constant dense<0.000000e+00> : vector<8x32xf32>
    %26 = vector.multi_reduction <add>, %25, %cst_13 [1] : vector<8x8x32xf32> to vector<8x32xf32>
    %27 = arith.addf %21, %26 : vector<8x32xf32>
    %c0_14 = arith.constant 0 : index
    %c0_15 = arith.constant 0 : index
    %28 = vector.load %arg4[%c0_14, %c0_15] : memref<8x32xf32, #tpu.memory_space<vmem>>, vector<8x32xf32>
    tpu.vector_store %arg4[%c0_14, %c0_15], %27 {strides = array<i32>} : memref<8x32xf32, #tpu.memory_space<vmem>>, vector<8x32xf32>,
    return
  }
  func.func @transform_0(%arg0: i32) -> (i32, i32, i32) {
    %c0_i32 = arith.constant 0 : i32
    %c0_i32_0 = arith.constant 0 : i32
    %c0_i32_1 = arith.constant 0 : i32
    return %arg0, %c0_i32, %c0_i32_0 : i32, i32, i32
  }
  func.func @transform_1(%arg0: i32) -> (i32, i32) {
    %c0_i32 = arith.constant 0 : i32
    %c0_i32_0 = arith.constant 0 : i32
    %c0_i32_1 = arith.constant 0 : i32
    return %c0_i32, %c0_i32_0 : i32, i32
  }
  func.func @transform_2(%arg0: i32) -> (i32, i32) {
    %c0_i32 = arith.constant 0 : i32
    %c0_i32_0 = arith.constant 0 : i32
    %c0_i32_1 = arith.constant 0 : i32
    return %c0_i32, %c0_i32_0 : i32, i32
  }
  func.func @transform_3(%arg0: i32) -> (i32, i32) {
    %c0_i32 = arith.constant 0 : i32
    %c0_i32_0 = arith.constant 0 : i32
    return %arg0, %c0_i32 : i32, i32
  }
}

</mosaic_0001>

<llo_original>
// kernel: tpu_custom_call.1
$region0: #{tpu_custom_call.1}
  #allocation0 [shape = 'u32[]', space=smem, size = 0x4, offset = 0x4, fixed_abs, tag = 'smem constant byte address 0x4 - core index']
  #allocation1 [shape = 'u32[72,128]{1,0:T(1,128)}', space=vmem, size = 0x9000, scoped, tag = 'internal scratch']
  %s0 = inlined_call_operand.hbm [shape: f32[8,8,32], index: 0, kind: input, shape index: {}]
  %s1 = inlined_call_operand.hbm [shape: f32[32,32], index: 1, kind: input, shape index: {}]
  %s2 = inlined_call_operand.vmem [shape: f32[1,32], index: 2, kind: input, shape index: {}]
  %s3 = inlined_call_operand.hbm [shape: f32[8,32], index: 3, kind: output, shape index: {}]
  %s4 = sld [smem:[#allocation0]]
  $region30: #{tpu_custom_call.1} parent=0
    _
  %s6 = ssub.s32 1, %s4
  %s7 = scalar_select 0, %s6, %s4
  $region1: #{tpu_custom_call.1} parent=0
    #allocation2 [shape = 'u8[32768]{0}', space=vmem, size = 0x8000, scoped, tag = 'input window, operand 0, single buffered']
    #allocation3 [shape = 's32[1]{0}', space=sflag, size = 0x4, scoped, tag = 'scoped memory for tpu_custom_call.1']
    #allocation4 [shape = 's32[1]{0}', space=sflag, size = 0x4, scoped, tag = 'scoped memory for tpu_custom_call.1']
    #allocation5 [shape = 'u8[16384]{0}', space=vmem, size = 0x4000, scoped, tag = 'input window, operand 1, single buffered']
    #allocation6 [shape = 's32[1]{0}', space=sflag, size = 0x4, scoped, tag = 'scoped memory for tpu_custom_call.1']
    #allocation7 [shape = 'u8[4096]{0}', space=vmem, size = 0x1000, scoped, tag = 'output window, operand 0, single buffered']
    %8 = vsyncpa [#allocation3], 0
    %9 = vsyncpa [#allocation6], 0
    %10 = vsyncpa [#allocation4], 0
    // Predicated region
    $region2: #{tpu_custom_call.1} parent=1 // pred_check
      _
    $region3: #{tpu_custom_call.1} parent=1 // pred_check_branch
      %12 = sbr.rel (0) target = $region5
    $region4: #{tpu_custom_call.1} parent=1 // pred_region
      %14 = vsyncadd [#allocation3], 0
      %s15 = sshll.u32 %s0, 4
      %s16 = int_to_ptr.hbm [resolvable:$true] %s15
      %s17 = sshll.u32 [#allocation2], 4
      %s18 = int_to_ptr.vmem [resolvable:$true] %s17
      %23 = dma.hbm_to_vmem [thread:$0]  %s16, 1024, %s18, [#allocation3], 128, 128, 8
    $region5: #{tpu_custom_call.1} parent=1 // pred_fallthru
      _
    // Predicated region
    $region6: #{tpu_custom_call.1} parent=1 // pred_check
      _
    $region7: #{tpu_custom_call.1} parent=1 // pred_check_branch
      %25 = sbr.rel (0) target = $region9
    $region8: #{tpu_custom_call.1} parent=1 // pred_region
      %27 = vsyncadd [#allocation6], 0
      %s28 = sshll.u32 %s1, 4
      %s29 = int_to_ptr.hbm [resolvable:$true] %s28
      %s30 = sshll.u32 [#allocation5], 4
      %s31 = int_to_ptr.vmem [resolvable:$true] %s30
      %36 = dma.hbm_to_vmem [thread:$0]  %s29, 512, %s31, [#allocation6], 128, 128, 8
    $region9: #{tpu_custom_call.1} parent=1 // pred_fallthru
      _
    // Predicated region
    $region10: #{tpu_custom_call.1} parent=1 // pred_check
      _
    $region11: #{tpu_custom_call.1} parent=1 // pred_check_branch
      %38 = sbr.rel (0) target = $region13
    $region12: #{tpu_custom_call.1} parent=1 // pred_region
      _
    $region13: #{tpu_custom_call.1} parent=1 // pred_fallthru
      _
    // Predicated region
    $region14: #{tpu_custom_call.1} parent=1 // pred_check
      _
    $region15: #{tpu_custom_call.1} parent=1 // pred_check_branch
      %40 = sbr.rel (0) target = $region17
    $region16: #{tpu_custom_call.1} parent=1 // pred_region
      %42 = dma.done [#allocation3], 1024
    $region17: #{tpu_custom_call.1} parent=1 // pred_fallthru
      _
    // Predicated region
    $region18: #{tpu_custom_call.1} parent=1 // pred_check
      _
    $region19: #{tpu_custom_call.1} parent=1 // pred_check_branch
      %44 = sbr.rel (0) target = $region21
    $region20: #{tpu_custom_call.1} parent=1 // pred_region
      %46 = dma.done [#allocation6], 512
    $region21: #{tpu_custom_call.1} parent=1 // pred_fallthru
      _
    %v47 = vld [vmem:[#allocation2] sm:$0xff]
    %v48 = vld [vmem:[#allocation2 + $0x8] sm:$0xff]
    %v49 = vld [vmem:[#allocation2 + $0x10] sm:$0xff]
    %v50 = vld [vmem:[#allocation2 + $0x18] sm:$0xff]
    %v51 = vld [vmem:[#allocation2 + $0x20] sm:$0xff]
    %v52 = vld [vmem:[#allocation2 + $0x28] sm:$0xff]
    %v53 = vld [vmem:[#allocation2 + $0x30] sm:$0xff]
    %v54 = vld [vmem:[#allocation2 + $0x38] sm:$0xff]
    %v55 = vld [vmem:[#allocation5] sm:$0xff]
    %v56 = vld [vmem:[#allocation5 + $0x8] sm:$0xff]
    %v57 = vld [vmem:[#allocation5 + $0x10] sm:$0xff]
    %v58 = vld [vmem:[#allocation5 + $0x18] sm:$0xff]
    %vm59 = vcmask 261120
    %v61 = vsel %vm59, %v47, 0
    %v64 = vsel %vm59, %v48, 0
    %v67 = vsel %vm59, %v49, 0
    %v70 = vsel %vm59, %v50, 0
    %v73 = vsel %vm59, %v51, 0
    %v76 = vsel %vm59, %v52, 0
    %v79 = vsel %vm59, %v53, 0
    %v82 = vsel %vm59, %v54, 0
    %84 = vmatpush.msra.mxu0 0.0
    %85 = vmatpush.msra.mxu0 0.0
    %86 = vmatpush.msra.mxu0 0.0
    %87 = vmatpush.msra.mxu0 0.0
    %88 = vmatpush.msra.mxu0 0.0
    %89 = vmatpush.msra.mxu0 0.0
    %90 = vmatpush.msra.mxu0 0.0
    %91 = vmatpush.msra.mxu0 0.0
    %92 = vmatpush.msra.mxu0 0.0
    %93 = vmatpush.msra.mxu0 0.0
    %94 = vmatpush.msra.mxu0 0.0
    %95 = vmatpush.msra.mxu0 0.0
    %96 = vmatpush.msra.mxu0 %v58
    %97 = vmatpush.msra.mxu0 %v57
    %98 = vmatpush.msra.mxu0 %v56
    %99 = vmatpush.msra.mxu0 %v55
    %100 = vmatmul.f32.gmra.mxu0 %v61
    %v101 = vpop.f32.mrf.mxu0
    %v102 = vadd.f32 0.0, %v101
    %103 = vmatmul.f32.gmra.mxu0 %v64
    %v104 = vpop.f32.mrf.mxu0
    %v105 = vadd.f32 0.0, %v104
    %106 = vmatmul.f32.gmra.mxu0 %v67
    %v107 = vpop.f32.mrf.mxu0
    %v108 = vadd.f32 0.0, %v107
    %109 = vmatmul.f32.gmra.mxu0 %v70
    %v110 = vpop.f32.mrf.mxu0
    %v111 = vadd.f32 0.0, %v110
    %112 = vmatmul.f32.gmra.mxu0 %v73
    %v113 = vpop.f32.mrf.mxu0
    %v114 = vadd.f32 0.0, %v113
    %115 = vmatmul.f32.gmra.mxu0 %v76
    %v116 = vpop.f32.mrf.mxu0
    %v117 = vadd.f32 0.0, %v116
    %118 = vmatmul.f32.gmra.mxu0 %v79
    %v119 = vpop.f32.mrf.mxu0
    %v120 = vadd.f32 0.0, %v119
    %121 = vmatmul.f32.gmra.mxu0 %v82
    %v122 = vpop.f32.mrf.mxu0
    %v123 = vadd.f32 0.0, %v122
    %124 = vdwg.mxu0
    %v125 = vtanh.pop %v102
    %v126 = vtanh.pop %v105
    %v127 = vtanh.pop %v108
    %v128 = vtanh.pop %v111
    %v129 = vtanh.pop %v114
    %v130 = vtanh.pop %v117
    %v131 = vtanh.pop %v120
    %v132 = vtanh.pop %v123
    %v133 = vld [vmem:[%s2] sm:$0x1]
    %v135 = vperm.slane %v133, 0
    %v137 = vmul.f32 %v125, %v135
    %v138 = vmul.f32 %v126, %v135
    %v139 = vmul.f32 %v127, %v135
    %v140 = vmul.f32 %v128, %v135
    %v141 = vmul.f32 %v129, %v135
    %v142 = vmul.f32 %v130, %v135
    %v143 = vmul.f32 %v131, %v135
    %v144 = vmul.f32 %v132, %v135
    %v145 = vsel %vm59, %v137, 0.0
    %146 = vadd.xlane.f32.xlu0 %v145
    %v147 = vpop.xlane.xlu0 %146
    %v148 = vsel %vm59, %v138, 0.0
    %149 = vadd.xlane.f32.xlu0 %v148
    %v150 = vpop.xlane.xlu0 %149
    %v151 = vsel %vm59, %v139, 0.0
    %152 = vadd.xlane.f32.xlu0 %v151
    %v153 = vpop.xlane.xlu0 %152
    %v154 = vsel %vm59, %v140, 0.0
    %155 = vadd.xlane.f32.xlu0 %v154
    %v156 = vpop.xlane.xlu0 %155
    %v157 = vsel %vm59, %v141, 0.0
    %158 = vadd.xlane.f32.xlu0 %v157
    %v159 = vpop.xlane.xlu0 %158
    %v160 = vsel %vm59, %v142, 0.0
    %161 = vadd.xlane.f32.xlu0 %v160
    %v162 = vpop.xlane.xlu0 %161
    %v163 = vsel %vm59, %v143, 0.0
    %164 = vadd.xlane.f32.xlu0 %v163
    %v165 = vpop.xlane.xlu0 %164
    %v166 = vsel %vm59, %v144, 0.0
    %167 = vadd.xlane.f32.xlu0 %v166
    %v168 = vpop.xlane.xlu0 %167
    %v177 = vlaneseq
    %v178 = vand.u32 %v177, 127
    %v179 = vperm.slane %v147, %v178
    %v180 = vperm.slane %v150, %v178
    %v181 = vperm.slane %v153, %v178
    %v182 = vperm.slane %v156, %v178
    %v183 = vperm.slane %v159, %v178
    %v184 = vperm.slane %v162, %v178
    %v185 = vperm.slane %v165, %v178
    %v186 = vperm.slane %v168, %v178
    %vm187 = vcmask 1041409
    %v188 = vsel %vm187, %v180, %v179
    %vm189 = vcmask 1042434
    %v190 = vsel %vm189, %v181, %v188
    %vm191 = vcmask 1043459
    %v192 = vsel %vm191, %v182, %v190
    %vm193 = vcmask 1044484
    %v194 = vsel %vm193, %v183, %v192
    %vm195 = vcmask 1045509
    %v196 = vsel %vm195, %v184, %v194
    %vm197 = vcmask 1046534
    %v198 = vsel %vm197, %v185, %v196
    %vm199 = vcmask 1047559
    %v200 = vsel %vm199, %v186, %v198
    %vm202 = vcmask 64512
    %v203 = vsel %vm202, %v200, -inf
    %204 = vmax.xlane.f32.xlu0 %v203
    %v205 = vpop.xlane.xlu0 %204
    %v207 = vperm.slane %v205, 0
    %v208 = vperm.slane %v205, 1
    %v209 = vperm.slane %v205, 2
    %v210 = vperm.slane %v205, 3
    %v211 = vperm.slane %v205, 4
    %v212 = vperm.slane %v205, 5
    %v213 = vperm.slane %v205, 6
    %v214 = vperm.slane %v205, 7
    %v223 = vsub.f32 %v147, %v207
    %v224 = vsub.f32 %v150, %v208
    %v225 = vsub.f32 %v153, %v209
    %v226 = vsub.f32 %v156, %v210
    %v227 = vsub.f32 %v159, %v211
    %v228 = vsub.f32 %v162, %v212
    %v229 = vsub.f32 %v165, %v213
    %v230 = vsub.f32 %v168, %v214
    %v231 = vmul.f32 %v223, 1.442695
    %v232 = vpow.pop %v231
    %v233 = vmul.f32 %v224, 1.442695
    %v234 = vpow.pop %v233
    %v235 = vmul.f32 %v225, 1.442695
    %v236 = vpow.pop %v235
    %v237 = vmul.f32 %v226, 1.442695
    %v238 = vpow.pop %v237
    %v239 = vmul.f32 %v227, 1.442695
    %v240 = vpow.pop %v239
    %v241 = vmul.f32 %v228, 1.442695
    %v242 = vpow.pop %v241
    %v243 = vmul.f32 %v229, 1.442695
    %v244 = vpow.pop %v243
    %v245 = vmul.f32 %v230, 1.442695
    %v246 = vpow.pop %v245
    %255 = vset.pattern.permute.xlu0 0
    %256 = vperm.xlu0 %255, %v232
    %v257 = vpop.permute.xlu0 %256
    %258 = vset.pattern.permute.xlu0 0
    %259 = vperm.xlu0 %258, %v234
    %v260 = vpop.permute.xlu0 %259
    %261 = vset.pattern.permute.xlu0 0
    %262 = vperm.xlu0 %261, %v236
    %v263 = vpop.permute.xlu0 %262
    %264 = vset.pattern.permute.xlu0 0
    %265 = vperm.xlu0 %264, %v238
    %v266 = vpop.permute.xlu0 %265
    %267 = vset.pattern.permute.xlu0 0
    %268 = vperm.xlu0 %267, %v240
    %v269 = vpop.permute.xlu0 %268
    %270 = vset.pattern.permute.xlu0 0
    %271 = vperm.xlu0 %270, %v242
    %v272 = vpop.permute.xlu0 %271
    %273 = vset.pattern.permute.xlu0 0
    %274 = vperm.xlu0 %273, %v244
    %v275 = vpop.permute.xlu0 %274
    %276 = vset.pattern.permute.xlu0 0
    %277 = vperm.xlu0 %276, %v246
    %v278 = vpop.permute.xlu0 %277
    %v279 = vperm.slane %v257, %v178
    %v280 = vperm.slane %v260, %v178
    %v281 = vperm.slane %v263, %v178
    %v282 = vperm.slane %v266, %v178
    %v283 = vperm.slane %v269, %v178
    %v284 = vperm.slane %v272, %v178
    %v285 = vperm.slane %v275, %v178
    %v286 = vperm.slane %v278, %v178
    %v287 = vsel %vm187, %v280, %v279
    %v288 = vsel %vm189, %v281, %v287
    %v289 = vsel %vm191, %v282, %v288
    %v290 = vsel %vm193, %v283, %v289
    %v291 = vsel %vm195, %v284, %v290
    %v292 = vsel %vm197, %v285, %v291
    %v293 = vsel %vm199, %v286, %v292
    %v295 = vsel %vm202, %v293, 0.0
    %296 = vadd.xlane.f32.xlu0 %v295
    %v297 = vpop.xlane.xlu0 %296
    %v298 = vrcp.pop %v297
    %v300 = vperm.slane %v298, 0
    %v301 = vperm.slane %v298, 1
    %v302 = vperm.slane %v298, 2
    %v303 = vperm.slane %v298, 3
    %v304 = vperm.slane %v298, 4
    %v305 = vperm.slane %v298, 5
    %v306 = vperm.slane %v298, 6
    %v307 = vperm.slane %v298, 7
    %v316 = vmul.f32 %v232, %v300
    %v317 = vmul.f32 %v234, %v301
    %v318 = vmul.f32 %v236, %v302
    %v319 = vmul.f32 %v238, %v303
    %v320 = vmul.f32 %v240, %v304
    %v321 = vmul.f32 %v242, %v305
    %v322 = vmul.f32 %v244, %v306
    %v323 = vmul.f32 %v246, %v307
    %325 = vset.pattern.permute.xlu0 0
    %326 = vperm.xlu0 %325, %v316
    %v327 = vpop.permute.xlu0 %326
    %330 = vset.pattern.permute.xlu0 0
    %331 = vperm.xlu0 %330, %v317
    %v332 = vpop.permute.xlu0 %331
    %335 = vset.pattern.permute.xlu0 0
    %336 = vperm.xlu0 %335, %v318
    %v337 = vpop.permute.xlu0 %336
    %340 = vset.pattern.permute.xlu0 0
    %341 = vperm.xlu0 %340, %v319
    %v342 = vpop.permute.xlu0 %341
    %345 = vset.pattern.permute.xlu0 0
    %346 = vperm.xlu0 %345, %v320
    %v347 = vpop.permute.xlu0 %346
    %350 = vset.pattern.permute.xlu0 0
    %351 = vperm.xlu0 %350, %v321
    %v352 = vpop.permute.xlu0 %351
    %355 = vset.pattern.permute.xlu0 0
    %356 = vperm.xlu0 %355, %v322
    %v357 = vpop.permute.xlu0 %356
    %360 = vset.pattern.permute.xlu0 0
    %361 = vperm.xlu0 %360, %v323
    %v362 = vpop.permute.xlu0 %361
    %v364 = vmul.f32 %v327, %v47
    %v365 = vmul.f32 %v332, %v48
    %v366 = vmul.f32 %v337, %v49
    %v367 = vmul.f32 %v342, %v50
    %v368 = vmul.f32 %v347, %v51
    %v369 = vmul.f32 %v352, %v52
    %v370 = vmul.f32 %v357, %v53
    %v371 = vmul.f32 %v362, %v54
    %v372 = vsel %vm59, %v364, 0.0
    %v373 = vrot.slane %v372, 4
    %v374 = vadd.f32 %v372, %v373
    %v375 = vrot.slane %v374, 2
    %v376 = vadd.f32 %v374, %v375
    %v377 = vrot.slane %v376, 1
    %v378 = vadd.f32 %v376, %v377
    %v379 = vsel %vm59, %v365, 0.0
    %v380 = vrot.slane %v379, 4
    %v381 = vadd.f32 %v379, %v380
    %v382 = vrot.slane %v381, 2
    %v383 = vadd.f32 %v381, %v382
    %v384 = vrot.slane %v383, 1
    %v385 = vadd.f32 %v383, %v384
    %v386 = vsel %vm59, %v366, 0.0
    %v387 = vrot.slane %v386, 4
    %v388 = vadd.f32 %v386, %v387
    %v389 = vrot.slane %v388, 2
    %v390 = vadd.f32 %v388, %v389
    %v391 = vrot.slane %v390, 1
    %v392 = vadd.f32 %v390, %v391
    %v393 = vsel %vm59, %v367, 0.0
    %v394 = vrot.slane %v393, 4
    %v395 = vadd.f32 %v393, %v394
    %v396 = vrot.slane %v395, 2
    %v397 = vadd.f32 %v395, %v396
    %v398 = vrot.slane %v397, 1
    %v399 = vadd.f32 %v397, %v398
    %v400 = vsel %vm59, %v368, 0.0
    %v401 = vrot.slane %v400, 4
    %v402 = vadd.f32 %v400, %v401
    %v403 = vrot.slane %v402, 2
    %v404 = vadd.f32 %v402, %v403
    %v405 = vrot.slane %v404, 1
    %v406 = vadd.f32 %v404, %v405
    %v407 = vsel %vm59, %v369, 0.0
    %v408 = vrot.slane %v407, 4
    %v409 = vadd.f32 %v407, %v408
    %v410 = vrot.slane %v409, 2
    %v411 = vadd.f32 %v409, %v410
    %v412 = vrot.slane %v411, 1
    %v413 = vadd.f32 %v411, %v412
    %v414 = vsel %vm59, %v370, 0.0
    %v415 = vrot.slane %v414, 4
    %v416 = vadd.f32 %v414, %v415
    %v417 = vrot.slane %v416, 2
    %v418 = vadd.f32 %v416, %v417
    %v419 = vrot.slane %v418, 1
    %v420 = vadd.f32 %v418, %v419
    %v421 = vsel %vm59, %v371, 0.0
    %v422 = vrot.slane %v421, 4
    %v423 = vadd.f32 %v421, %v422
    %v424 = vrot.slane %v423, 2
    %v425 = vadd.f32 %v423, %v424
    %v426 = vrot.slane %v425, 1
    %v427 = vadd.f32 %v425, %v426
    %v428 = vadd.f32 %v378, 0.0
    %v429 = vadd.f32 %v385, 0.0
    %v430 = vadd.f32 %v392, 0.0
    %v431 = vadd.f32 %v399, 0.0
    %v432 = vadd.f32 %v406, 0.0
    %v433 = vadd.f32 %v413, 0.0
    %v434 = vadd.f32 %v420, 0.0
    %v435 = vadd.f32 %v427, 0.0
    %v444 = vsel %vm187, %v429, %v428
    %v445 = vsel %vm189, %v430, %v444
    %v446 = vsel %vm191, %v431, %v445
    %v447 = vsel %vm193, %v432, %v446
    %v448 = vsel %vm195, %v433, %v447
    %v449 = vsel %vm197, %v434, %v448
    %v450 = vsel %vm199, %v435, %v449
    %452 = vst.msk [vmem:[#allocation7] sm:$0xff] %vm59, %v450
    // Predicated region
    $region22: #{tpu_custom_call.1} parent=1 // pred_check
      _
    $region23: #{tpu_custom_call.1} parent=1 // pred_check_branch
      %454 = sbr.rel (0) target = $region25
    $region24: #{tpu_custom_call.1} parent=1 // pred_region
      %456 = vsyncadd [#allocation4], 0
      %s458 = sshll.u32 [#allocation7], 4
      %s459 = int_to_ptr.vmem [resolvable:$true] %s458
      %s460 = sshll.u32 %s3, 4
      %s461 = int_to_ptr.hbm [resolvable:$true] %s460
      %463 = dma.vmem_to_hbm [thread:$0]  %s459, 128, %s461, [#allocation4]
    $region25: #{tpu_custom_call.1} parent=1 // pred_fallthru
      _
    // Predicated region
    $region26: #{tpu_custom_call.1} parent=1 // pred_check
      _
    $region27: #{tpu_custom_call.1} parent=1 // pred_check_branch
      %465 = sbr.rel (0) target = $region29
    $region28: #{tpu_custom_call.1} parent=1 // pred_region
      %467 = dma.done [#allocation4], 128
    $region29: #{tpu_custom_call.1} parent=1 // pred_fallthru
      _
    %468 = vsyncpa [#allocation3], 1
    %469 = vsyncpa [#allocation6], 1
    %470 = vsyncpa [#allocation4], 1

</llo_original>
